<compile_context>
chip_gen: v7x
topology: tpu7x:2x2x1
jax: 0.10.0
libtpu: 0.0.40
codegen_flags: <defaults>
</compile_context>

<pallas_src>
import functools

import jax
import jax.numpy as jnp
from jax.experimental import pallas as pl
from jax.experimental.pallas import tpu as pltpu


def _focal_loss_kernel(*refs, alpha, gamma, eps, gamma_int, has_weight,
                       fuse_reduce, hw, tp):
    """One tile.

    refs (has_weight=True):  x_ref (1,C,TP), t_ref (1,1,TP), w_ref (C,1), o_ref
    refs (has_weight=False): x_ref (1,C,TP), t_ref (1,1,TP), o_ref
    o_ref is (1,1,TP) in the logits dtype for reduction='none', or a
    (1,1,128) f32 partial-sum row when the reduction is fused.
    """
    if has_weight:
        x_ref, t_ref, w_ref, o_ref = refs
    else:
        x_ref, t_ref, o_ref = refs
        w_ref = None

    x = x_ref[0].astype(jnp.float32)             # (C, TP)
    tgt = t_ref[0]                               # (1, TP) int32
    C, TP = x.shape

    # softmax pieces over the class (sublane) axis: C exps per pixel
    m = jnp.max(x, axis=0, keepdims=True)        # (1, TP)
    e = jnp.exp(x - m)                           # (C, TP)
    denom = jnp.sum(e, axis=0, keepdims=True)    # (1, TP)

    # target-class gather via a bool mask (no f32 one-hot materialization)
    cls = jax.lax.broadcasted_iota(jnp.int32, (C, TP), 0)
    cls_mask = cls == tgt                        # (C, TP) bool
    e_t = jnp.sum(jnp.where(cls_mask, e, 0.0), axis=0, keepdims=True)  # (1, TP)

    # p_t = softmax_t + eps, matching the reference's log(softmax + eps)
    p_t = e_t / denom + eps                      # (1, TP)
    logp_t = jnp.log(p_t)                        # one log / pixel
    om = 1.0 - p_t

    if gamma_int is not None:
        # integer gamma fast path: square-and-multiply, pure VPU
        if gamma_int == 0:
            fw = jnp.ones_like(p_t)
        else:
            fw = None
            base = om
            g = gamma_int
            while True:
                if g & 1:
                    fw = base if fw is None else fw * base
                g >>= 1
                if g == 0:
                    break
                base = base * base
    else:
        # clamp avoids NaN from pow(negative, non-integer) when p_t > 1 by O(eps)
        fw = jnp.power(jnp.maximum(om, 0.0), gamma)

    loss = (-alpha) * fw * logp_t                # (1, TP)

    if has_weight:
        w = w_ref[...].astype(jnp.float32)       # (C, 1)
        w_t = jnp.sum(jnp.where(cls_mask, w, 0.0), axis=0, keepdims=True)
        loss = loss * w_t

    # ragged tail: zero out lanes past the true pixel count
    if (hw % tp) != 0:
        lane = jax.lax.broadcasted_iota(jnp.int32, (1, TP), 1)
        valid = (pl.program_id(1) * tp + lane) < hw
        loss = jnp.where(valid, loss, 0.0)

    if fuse_reduce:
        # per-tile partial sum, written into lane 0 of a 128-wide f32 row
        s = jnp.sum(loss, axis=1, keepdims=True).reshape(1, 1, 1)   # (1,1,1)
        lane128 = jax.lax.broadcasted_iota(jnp.int32, (1, 1, 128), 2)
        o_ref[...] = jnp.where(lane128 == 0, s, 0.0)
    else:
        o_ref[0] = loss.astype(o_ref.dtype)


def _round_up(a, b):
    return ((a + b - 1) // b) * b


def _cdiv(a, b):
    return -(-a // b)


def focal_loss(logits_nchw, target_nhw, *, alpha, gamma=2.0, reduction="none",
               weight_ce=None, eps=1e-6, vmem_budget_bytes=20 << 20):
    """Pallas FocalLoss forward. logits_nchw: (N,C,H,W), target_nhw: (N,H,W) int."""
    N, C, H, W = logits_nchw.shape
    HW = H * W

    # Free reshapes: NCHW -> (N, C, HW); labels -> (N, 1, HW).  No padding.
    x = logits_nchw.reshape(N, C, HW)
    tgt = target_nhw.reshape(N, 1, HW).astype(jnp.int32)

    # ---- tile size from a corrected VMEM budget (not from divisibility) ----
    itemsize = jnp.dtype(x.dtype).itemsize
    c_in_pad = _round_up(C, max(8, 32 // itemsize))   # sublane-padded C (input dtype)
    c_f32_pad = _round_up(C, 8)                       # sublane-padded C (f32 temps)
    # per-lane bytes: double-buffered native logits tile + ~5 f32 (C, tp)
    # Mosaic temporaries (x_f32, e, iota/mask, masked products) + small rows.
    per_lane = 2 * c_in_pad * itemsize + 5 * c_f32_pad * 4 + 64
    tp = max(128, min(8192, (vmem_budget_bytes // per_lane) // 128 * 128))
    tp = min(tp, _round_up(HW, 128))
    n_tiles = _cdiv(HW, tp)
    # keep >= 2 programs so the megacore split (2 TCs on v7x) has work for both
    if N * n_tiles < 2 and tp > 128:
        tp = max(128, _round_up(_cdiv(HW, 2), 128))
        n_tiles = _cdiv(HW, tp)
    vmem_limit = int(min(48 << 20, max(32 << 20, 2 * per_lane * tp)))

    g = float(gamma)
    gamma_int = int(g) if (g.is_integer() and 0.0 <= g <= 8.0) else None
    has_weight = weight_ce is not None
    fuse_reduce = reduction in ("mean", "sum")
    if reduction not in ("none", "mean", "sum"):
        raise NotImplementedError(f"Invalid reduction mode: {reduction}")

    kernel = functools.partial(
        _focal_loss_kernel, alpha=float(alpha), gamma=g, eps=float(eps),
        gamma_int=gamma_int, has_weight=has_weight, fuse_reduce=fuse_reduce,
        hw=HW, tp=tp)

    in_specs = [
        pl.BlockSpec((1, C, tp), lambda n, p: (n, 0, p)),   # logits tile
        pl.BlockSpec((1, 1, tp), lambda n, p: (n, 0, p)),   # labels tile
    ]
    args = [x, tgt]
    if has_weight:
        w = jnp.asarray(weight_ce, jnp.float32).reshape(C, 1)
        in_specs.append(pl.BlockSpec((C, 1), lambda n, p: (0, 0)))
        args.append(w)

    if fuse_reduce:
        out_shape = jax.ShapeDtypeStruct((N, 1, n_tiles * 128), jnp.float32)
        out_spec = pl.BlockSpec((1, 1, 128), lambda n, p: (n, 0, p))
    else:
        out_shape = jax.ShapeDtypeStruct((N, 1, n_tiles * tp), logits_nchw.dtype)
        out_spec = pl.BlockSpec((1, 1, tp), lambda n, p: (n, 0, p))

    out = pl.pallas_call(
        kernel,
        out_shape=out_shape,
        grid_spec=pltpu.PrefetchScalarGridSpec(
            num_scalar_prefetch=0,
            grid=(N, n_tiles),
            in_specs=in_specs,
            out_specs=out_spec,
        ),
        compiler_params=pltpu.CompilerParams(
            dimension_semantics=("parallel", "parallel"),
            vmem_limit_bytes=vmem_limit),
    )(*args)

    if reduction == "none":
        loss_map = out[:, 0, :HW] if n_tiles * tp != HW else out[:, 0, :]
        return loss_map.reshape(N, H, W)
    elif reduction == "mean":
        return (jnp.sum(out) / float(N * HW)).astype(logits_nchw.dtype)
    else:  # "sum"
        return jnp.sum(out).astype(logits_nchw.dtype)


def _focal_loss_ref(logits_nchw, target_nhw, *, alpha, gamma, eps=1e-6,
                    weight_ce=None):
    """Pure-JAX reference (mirrors the kornia/PyTorch module)."""
    C = logits_nchw.shape[1]
    p = jax.nn.softmax(logits_nchw.astype(jnp.float32), axis=1) + eps
    focal = (-alpha) * jnp.power(1.0 - p, gamma) * jnp.log(p)
    if weight_ce is not None:
        focal = focal * jnp.asarray(weight_ce, jnp.float32).reshape(1, C, 1, 1)
    oh = jax.nn.one_hot(target_nhw, C, axis=1, dtype=jnp.float32)
    return jnp.sum(oh * focal, axis=1)


if __name__ == "__main__":
    key = jax.random.PRNGKey(0)
    k1, k2, k3, k4 = jax.random.split(key, 4)

    alpha, gamma = 0.5, 2.0

    # ---- case 1: aligned spatial size (H*W multiple of 128) ----
    N, C, H, W = 2, 4, 16, 16
    logits = jax.random.normal(k1, (N, C, H, W), dtype=jnp.float32)
    target = jax.random.randint(k2, (N, H, W), minval=0, maxval=C, dtype=jnp.int32)

    loss_none = jax.block_until_ready(
        focal_loss(logits, target, alpha=alpha, gamma=gamma, reduction="none"))
    loss_mean = jax.block_until_ready(
        focal_loss(logits, target, alpha=alpha, gamma=gamma, reduction="mean"))
    loss_sum = jax.block_until_ready(
        focal_loss(logits, target, alpha=alpha, gamma=gamma, reduction="sum"))
    wce = jnp.array([1.0, 2.0, 0.5, 1.5], jnp.float32)
    loss_w = jax.block_until_ready(
        focal_loss(logits, target, alpha=alpha, gamma=gamma, reduction="none",
                   weight_ce=wce))

    ref = _focal_loss_ref(logits, target, alpha=alpha, gamma=gamma)
    ref_w = _focal_loss_ref(logits, target, alpha=alpha, gamma=gamma, weight_ce=wce)
    assert loss_none.shape == (N, H, W)
    assert jnp.allclose(loss_none, ref, atol=1e-5, rtol=1e-5), "mismatch vs reference"
    assert jnp.allclose(loss_mean, jnp.mean(ref), atol=1e-5, rtol=1e-5), "mean mismatch"
    assert jnp.allclose(loss_sum, jnp.sum(ref), atol=1e-4, rtol=1e-5), "sum mismatch"
    assert jnp.allclose(loss_w, ref_w, atol=1e-5, rtol=1e-5), "weighted mismatch"

    # ---- case 2: ragged spatial size (H*W not a multiple of 128) ----
    N2, C2, H2, W2 = 2, 4, 10, 10
    logits2 = jax.random.normal(k3, (N2, C2, H2, W2), dtype=jnp.float32)
    target2 = jax.random.randint(k4, (N2, H2, W2), minval=0, maxval=C2,
                                 dtype=jnp.int32)
    loss2_none = jax.block_until_ready(
        focal_loss(logits2, target2, alpha=alpha, gamma=gamma, reduction="none"))
    loss2_mean = jax.block_until_ready(
        focal_loss(logits2, target2, alpha=alpha, gamma=gamma, reduction="mean"))
    ref2 = _focal_loss_ref(logits2, target2, alpha=alpha, gamma=gamma)
    assert loss2_none.shape == (N2, H2, W2)
    assert jnp.allclose(loss2_none, ref2, atol=1e-5, rtol=1e-5), "ragged mismatch"
    assert jnp.allclose(loss2_mean, jnp.mean(ref2), atol=1e-5, rtol=1e-5), \
        "ragged mean mismatch"

    print("KERNEL_OK")
</pallas_src>

<mosaic_0001>
module attributes {stable_mosaic.version = 11 : i64} {
  func.func @_focal_loss_kernel(%arg0: i32, %arg1: i32, %arg2: memref<1x4x256xf32, #tpu.memory_space<vmem>>, %arg3: memref<1x1x256xi32, #tpu.memory_space<vmem>>, %arg4: memref<1x1x256xf32, #tpu.memory_space<vmem>>) attributes {dimension_semantics = [#tpu.dimension_semantics<parallel>, #tpu.dimension_semantics<parallel>], iteration_bounds = array<i64: 2, 1>, scalar_prefetch = 0 : i64, scratch_operands = 0 : i64, tpu.core_type = #tpu.core_type<tc>, window_params = [{transform_indices = @transform_0, window_bounds = array<i64: 1, 4, 256>}, {transform_indices = @transform_1, window_bounds = array<i64: 1, 1, 256>}, {transform_indices = @transform_2, window_bounds = array<i64: 1, 1, 256>}]} {
    %c0 = arith.constant 0 : index
    %c0_0 = arith.constant 0 : index
    %c0_1 = arith.constant 0 : index
    %0 = vector.load %arg2[%c0, %c0_0, %c0_1] : memref<1x4x256xf32, #tpu.memory_space<vmem>>, vector<1x4x256xf32>
    %1 = vector.shape_cast %0 : vector<1x4x256xf32> to vector<4x256xf32>
    %c0_2 = arith.constant 0 : index
    %c0_3 = arith.constant 0 : index
    %c0_4 = arith.constant 0 : index
    %2 = vector.load %arg3[%c0_2, %c0_3, %c0_4] : memref<1x1x256xi32, #tpu.memory_space<vmem>>, vector<1x1x256xi32>
    %3 = vector.shape_cast %2 : vector<1x1x256xi32> to vector<1x256xi32>
    %cst = arith.constant dense<0xFF800000> : vector<256xf32>
    %4 = vector.multi_reduction <maximumf>, %1, %cst [0] : vector<4x256xf32> to vector<256xf32>
    %5 = vector.shape_cast %4 : vector<256xf32> to vector<1x256xf32>
    %6 = vector.broadcast %5 : vector<1x256xf32> to vector<4x256xf32>
    %7 = arith.subf %1, %6 : vector<4x256xf32>
    %8 = math.exp %7 : vector<4x256xf32>
    %cst_5 = arith.constant dense<0.000000e+00> : vector<256xf32>
    %9 = vector.multi_reduction <add>, %8, %cst_5 [0] : vector<4x256xf32> to vector<256xf32>
    %10 = vector.shape_cast %9 : vector<256xf32> to vector<1x256xf32>
    %11 = tpu.iota {dimensions = array<i32: 0>} : vector<4x256xi32>
    %12 = vector.broadcast %3 : vector<1x256xi32> to vector<4x256xi32>
    %13 = arith.cmpi eq, %11, %12 : vector<4x256xi32>
    %cst_6 = arith.constant 0.000000e+00 : f32
    %14 = vector.broadcast %cst_6 : f32 to vector<4x256xf32>
    %15 = arith.select %13, %8, %14 : vector<4x256xi1>, vector<4x256xf32>
    %cst_7 = arith.constant dense<0.000000e+00> : vector<256xf32>
    %16 = vector.multi_reduction <add>, %15, %cst_7 [0] : vector<4x256xf32> to vector<256xf32>
    %17 = vector.shape_cast %16 : vector<256xf32> to vector<1x256xf32>
    %18 = arith.divf %17, %10 : vector<1x256xf32>
    %cst_8 = arith.constant 9.99999997E-7 : f32
    %19 = vector.broadcast %cst_8 : f32 to vector<1x256xf32>
    %20 = arith.addf %18, %19 : vector<1x256xf32>
    %21 = math.log %20 : vector<1x256xf32>
    %cst_9 = arith.constant 1.000000e+00 : f32
    %22 = vector.broadcast %cst_9 : f32 to vector<1x256xf32>
    %23 = arith.subf %22, %20 : vector<1x256xf32>
    %24 = arith.mulf %23, %23 : vector<1x256xf32>
    %cst_10 = arith.constant -5.000000e-01 : f32
    %25 = vector.broadcast %cst_10 : f32 to vector<1x256xf32>
    %26 = arith.mulf %25, %24 : vector<1x256xf32>
    %27 = arith.mulf %26, %21 : vector<1x256xf32>
    %c0_11 = arith.constant 0 : index
    %c0_12 = arith.constant 0 : index
    %c0_13 = arith.constant 0 : index
    %28 = vector.load %arg4[%c0_11, %c0_12, %c0_13] : memref<1x1x256xf32, #tpu.memory_space<vmem>>, vector<1x1x256xf32>
    %29 = vector.shape_cast %28 : vector<1x1x256xf32> to vector<1x256xf32>
    %30 = vector.shape_cast %27 : vector<1x256xf32> to vector<1x1x256xf32>
    tpu.vector_store %arg4[%c0_11, %c0_12, %c0_13], %30 {strides = array<i32>} : memref<1x1x256xf32, #tpu.memory_space<vmem>>, vector<1x1x256xf32>,
    return
  }
  func.func @transform_0(%arg0: i32, %arg1: i32) -> (i32, i32, i32) {
    %c0_i32 = arith.constant 0 : i32
    %c0_i32_0 = arith.constant 0 : i32
    return %arg0, %c0_i32, %arg1 : i32, i32, i32
  }
  func.func @transform_1(%arg0: i32, %arg1: i32) -> (i32, i32, i32) {
    %c0_i32 = arith.constant 0 : i32
    %c0_i32_0 = arith.constant 0 : i32
    return %arg0, %c0_i32, %arg1 : i32, i32, i32
  }
  func.func @transform_2(%arg0: i32, %arg1: i32) -> (i32, i32, i32) {
    %c0_i32 = arith.constant 0 : i32
    %c0_i32_0 = arith.constant 0 : i32
    return %arg0, %c0_i32, %arg1 : i32, i32, i32
  }
}

</mosaic_0001>

<llo_original>
// kernel: tpu_custom_call.1
$region0: #{tpu_custom_call.1}
  #allocation0 [shape = 'u32[]', space=smem, size = 0x4, offset = 0x4, fixed_abs, tag = 'smem constant byte address 0x4 - core index']
  #allocation1 [shape = 'u32[144,128]{1,0:T(1,128)}', space=vmem, size = 0x12000, scoped, tag = 'internal scratch']
  %s0 = inlined_call_operand.hbm [shape: f32[2,4,256], index: 0, kind: input, shape index: {}]
  %s1 = inlined_call_operand.hbm [shape: s32[2,1,256], index: 1, kind: input, shape index: {}]
  %s2 = inlined_call_operand.hbm [shape: f32[2,1,256], index: 2, kind: output, shape index: {}]
  %s3 = sld [smem:[#allocation0]]
  $region49: #{tpu_custom_call.1} parent=0
    _
  %s5 = ssub.s32 1, %s3
  %s6 = scalar_select 0, %s5, %s3
  $region1: #{tpu_custom_call.1} parent=0
    #allocation2 [shape = 'u8[8192]{0}', space=vmem, size = 0x2000, scoped, tag = 'input window, operand 0']
    #allocation3 [shape = 's32[2]{0}', space=sflag, size = 0x8, scoped, tag = 'scoped memory for tpu_custom_call.1']
    #allocation4 [shape = 's32[2]{0}', space=sflag, size = 0x8, scoped, tag = 'scoped memory for tpu_custom_call.1']
    #allocation5 [shape = 'u8[2048]{0}', space=vmem, size = 0x800, scoped, tag = 'input window, operand 1']
    #allocation6 [shape = 's32[2]{0}', space=sflag, size = 0x8, scoped, tag = 'scoped memory for tpu_custom_call.1']
    #allocation7 [shape = 'u8[2048]{0}', space=vmem, size = 0x800, scoped, tag = 'output window, operand 0']
    %7 = vsyncpa [#allocation3], 0
    %s8 = scalar_lea.sflag [#allocation3], 1
    %9 = vsyncpa %s8, 0
    %10 = vsyncpa [#allocation6], 0
    %s11 = scalar_lea.sflag [#allocation6], 1
    %12 = vsyncpa %s11, 0
    %13 = vsyncpa [#allocation4], 0
    %s14 = scalar_lea.sflag [#allocation4], 1
    %15 = vsyncpa %s14, 0
    loop: start=0, step=1, limit=4
    $region2: #{tpu_custom_call.1} parent=1 // loop_pre_header
      _
    $region3: #{tpu_custom_call.1} parent=1 // loop_header
      %s17 = sphi 0, %s21
      %p18 = scmp.ge.s32.totalorder %s17, 4
      %s24 = sphi 0, %s36
      %s25 = sphi 0, %s32
      %s26 = sphi 0, %s24
      %s27 = sphi 0, %s25
      %s28 = sphi 0, %s26
      %s29 = sphi 0, %s27
      %s41 = sphi 0, %s43
      %s44 = sphi 0, %s41
      %s45 = sphi 0, %s44
      %s61 = sphi 0, %s45
      %s69 = sphi 0, %s71
      %s72 = sphi 0, %s69
      %s73 = sphi 0, %s72
      %s89 = sphi 0, %s73
      %s97 = sphi 0, %s99
      %s100 = sphi 0, %s97
      %s101 = sphi 0, %s100
      %s117 = sphi 0, %s101
    $region4: #{tpu_custom_call.1} parent=1 // loop_header_branch
      %20 = sbr.rel (%p18) target = $region8
    $region5: #{tpu_custom_call.1} parent=1 // loop_body
      %s22 = ssub.s32 %s17, 1
      %s23 = ssub.s32 %s17, 2
      %s30 = sadd.s32 1, %s25
      %p31 = scmp.ge.s32.totalorder %s30, 1
      %s32 = scalar_select %p31, 0, %s30
      %s33 = sadd.s32 1, %s24
      %s34 = scalar_select %p31, %s33, %s24
      %p35 = scmp.ge.s32.totalorder %s34, 2
      %s36 = scalar_select %p35, 0, %s34
      %s37 = ssub.s32 %s24, %s36
      %s38 = ssub.s32 %s25, %s32
      %s39 = sor.u32 %s37, %s38
      %p40 = scmp.eq.s32.totalorder %s39, 0
      %s42 = sadd.s32 %s41, 1
      %s43 = scalar_select %p40, %s41, %s42
      %p46 = pneg %p40
      %p47 = scmp.eq.s32.totalorder %s17, 1
      %p48 = por %p46, %p47
      %p49 = scmp.ne.s32.totalorder %s41, %s44
      %p50 = scmp.eq.s32.totalorder %s17, 0
      %p51 = por %p49, %p50
      %p52 = scmp.ne.s32.totalorder %s41, %s44
      %p53 = scmp.eq.s32.totalorder %s22, 1
      %p54 = por %p52, %p53
      %p55 = scmp.ne.s32.totalorder %s44, %s45
      %p56 = scmp.eq.s32.totalorder %s22, 0
      %p57 = por %p55, %p56
      %p58 = scmp.ne.s32.totalorder %s44, %s45
      %p59 = scmp.eq.s32.totalorder %s23, 1
      %p60 = por %p58, %p59
      %p62 = scmp.ne.s32.totalorder %s45, %s61
      %p63 = scmp.eq.s32.totalorder %s23, 0
      %p64 = por %p62, %p63
      %s65 = ssub.s32 %s24, %s36
      %s66 = ssub.s32 %s25, %s32
      %s67 = sor.u32 %s65, %s66
      %p68 = scmp.eq.s32.totalorder %s67, 0
      %s70 = sadd.s32 %s69, 1
      %s71 = scalar_select %p68, %s69, %s70
      %p74 = pneg %p68
      %p75 = scmp.eq.s32.totalorder %s17, 1
      %p76 = por %p74, %p75
      %p77 = scmp.ne.s32.totalorder %s69, %s72
      %p78 = scmp.eq.s32.totalorder %s17, 0
      %p79 = por %p77, %p78
      %p80 = scmp.ne.s32.totalorder %s69, %s72
      %p81 = scmp.eq.s32.totalorder %s22, 1
      %p82 = por %p80, %p81
      %p83 = scmp.ne.s32.totalorder %s72, %s73
      %p84 = scmp.eq.s32.totalorder %s22, 0
      %p85 = por %p83, %p84
      %p86 = scmp.ne.s32.totalorder %s72, %s73
      %p87 = scmp.eq.s32.totalorder %s23, 1
      %p88 = por %p86, %p87
      %p90 = scmp.ne.s32.totalorder %s73, %s89
      %p91 = scmp.eq.s32.totalorder %s23, 0
      %p92 = por %p90, %p91
      %s93 = ssub.s32 %s24, %s36
      %s94 = ssub.s32 %s25, %s32
      %s95 = sor.u32 %s93, %s94
      %p96 = scmp.eq.s32.totalorder %s95, 0
      %s98 = sadd.s32 %s97, 1
      %s99 = scalar_select %p96, %s97, %s98
      %p102 = pneg %p96
      %p103 = scmp.eq.s32.totalorder %s17, 1
      %p104 = por %p102, %p103
      %p105 = scmp.ne.s32.totalorder %s97, %s100
      %p106 = scmp.eq.s32.totalorder %s17, 0
      %p107 = por %p105, %p106
      %p108 = scmp.ne.s32.totalorder %s97, %s100
      %p109 = scmp.eq.s32.totalorder %s22, 1
      %p110 = por %p108, %p109
      %p111 = scmp.ne.s32.totalorder %s100, %s101
      %p112 = scmp.eq.s32.totalorder %s22, 0
      %p113 = por %p111, %p112
      %p114 = scmp.ne.s32.totalorder %s100, %s101
      %p115 = scmp.eq.s32.totalorder %s23, 1
      %p116 = por %p114, %p115
      %p118 = scmp.ne.s32.totalorder %s101, %s117
      %p119 = scmp.eq.s32.totalorder %s23, 0
      %p120 = por %p118, %p119
      %p121 = scmp.le.s32.totalorder 1, %s17
      %p122 = scmp.lt.s32.totalorder %s17, 3
      %p123 = pnand %p121, %p122
      %p124 = pneg %p123
      // Predicated region
      $region9: #{tpu_custom_call.1} parent=5 // pred_check
        _
      $region10: #{tpu_custom_call.1} parent=5 // pred_check_branch
        %126 = sbr.rel (%p123) target = $region12
      $region11: #{tpu_custom_call.1} parent=5 // pred_region
        %s127 = ssub.s32 %s17, 1
      $region12: #{tpu_custom_call.1} parent=5 // pred_fallthru
        _
      %p128 = scmp.lt.s32.totalorder %s17, 2
      // Predicated region
      $region13: #{tpu_custom_call.1} parent=5 // pred_check
        %p129 = pneg %p128
      $region14: #{tpu_custom_call.1} parent=5 // pred_check_branch
        %131 = sbr.rel (%p129) target = $region16
      $region15: #{tpu_custom_call.1} parent=5 // pred_region
        // Predicated region
        $region17: #{tpu_custom_call.1} parent=15 // pred_check
          %p132 = pneg %p51
        $region18: #{tpu_custom_call.1} parent=15 // pred_check_branch
          %134 = sbr.rel (%p132) target = $region20
        $region19: #{tpu_custom_call.1} parent=15 // pred_region
          %s135 = sand.u32 %s41, 1
          %s136 = scalar_lea.sflag [#allocation3], %s135
          %s137 = sand.u32 %s41, 1
          %s138 = smul.addr %s137, 8
          %s139 = scalar_lea.vmem [#allocation2], %s138
          %s140 = smul.u32 2, %s25
          %s142 = ssub.s32 128, 128
          %143 = vsyncadd %s136, %s142
          %s144 = smul.addr %s24, 2
          %s145 = sadd.s32 %s140, %s144
          %s146 = smul.addr %s145, 64
          %s147 = scalar_lea.hbm %s0, %s146
          %s149 = sshll.u32 %s139, 4
          %s150 = int_to_ptr.vmem [resolvable:$true] %s149
          %152 = dma.hbm_to_vmem [thread:$0]  %s147, 128, %s150, %s136
        $region20: #{tpu_custom_call.1} parent=15 // pred_fallthru
          _
        // Predicated region
        $region21: #{tpu_custom_call.1} parent=15 // pred_check
          %p153 = pneg %p79
        $region22: #{tpu_custom_call.1} parent=15 // pred_check_branch
          %155 = sbr.rel (%p153) target = $region24
        $region23: #{tpu_custom_call.1} parent=15 // pred_region
          %s156 = sand.u32 %s69, 1
          %s157 = scalar_lea.sflag [#allocation6], %s156
          %s158 = sand.u32 %s69, 1
          %s159 = smul.addr %s158, 2
          %s160 = scalar_lea.vmem [#allocation5], %s159
          %s161 = smul.u32 2, %s25
          %s163 = ssub.s32 32, 32
          %164 = vsyncadd %s157, %s163
          %s165 = smul.addr %s24, 2
          %s166 = sadd.s32 %s161, %s165
          %s167 = smul.addr %s166, 16
          %s168 = scalar_lea.hbm %s1, %s167
          %s170 = sshll.u32 %s160, 4
          %s171 = int_to_ptr.vmem [resolvable:$true] %s170
          %173 = dma.hbm_to_vmem [thread:$0]  %s168, 32, %s171, %s157
        $region24: #{tpu_custom_call.1} parent=15 // pred_fallthru
          _
      $region16: #{tpu_custom_call.1} parent=5 // pred_fallthru
        _
      %p174 = scmp.le.s32.totalorder 1, %s17
      %p175 = scmp.lt.s32.totalorder %s17, 3
      %p176 = pnand %p174, %p175
      %p177 = pneg %p176
      // Predicated region
      $region25: #{tpu_custom_call.1} parent=5 // pred_check
        _
      $region26: #{tpu_custom_call.1} parent=5 // pred_check_branch
        %179 = sbr.rel (%p176) target = $region28
      $region27: #{tpu_custom_call.1} parent=5 // pred_region
        %s180 = ssub.s32 %s17, 1
        %s181 = sand.u32 %s44, 1
        %s182 = scalar_lea.sflag [#allocation3], %s181
        %s183 = sand.u32 %s44, 1
        %s184 = smul.addr %s183, 8
        %s185 = scalar_lea.vmem [#allocation2], %s184
        // Predicated region
        $region29: #{tpu_custom_call.1} parent=27 // pred_check
          %p186 = pneg %p57
        $region30: #{tpu_custom_call.1} parent=27 // pred_check_branch
          %188 = sbr.rel (%p186) target = $region32
        $region31: #{tpu_custom_call.1} parent=27 // pred_region
          %189 = dma.done %s182, 128
        $region32: #{tpu_custom_call.1} parent=27 // pred_fallthru
          _
        %s190 = sand.u32 %s72, 1
        %s191 = scalar_lea.sflag [#allocation6], %s190
        %s192 = sand.u32 %s72, 1
        %s193 = smul.addr %s192, 2
        %s194 = scalar_lea.vmem [#allocation5], %s193
        // Predicated region
        $region33: #{tpu_custom_call.1} parent=27 // pred_check
          %p195 = pneg %p85
        $region34: #{tpu_custom_call.1} parent=27 // pred_check_branch
          %197 = sbr.rel (%p195) target = $region36
        $region35: #{tpu_custom_call.1} parent=27 // pred_region
          %198 = dma.done %s191, 32
        $region36: #{tpu_custom_call.1} parent=27 // pred_fallthru
          _
        %s199 = sand.u32 %s44, 1
        %s200 = scalar_lea.sflag [#allocation3], %s199
        %s201 = sand.u32 %s44, 1
        %s202 = smul.addr %s201, 8
        %s203 = scalar_lea.vmem [#allocation2], %s202
        %p204 = pneg %p57
        %p205 = pneg %p54
        %s206 = sand.u32 %s72, 1
        %s207 = scalar_lea.sflag [#allocation6], %s206
        %s208 = sand.u32 %s72, 1
        %s209 = smul.addr %s208, 2
        %s210 = scalar_lea.vmem [#allocation5], %s209
        %p211 = pneg %p85
        %p212 = pneg %p82
        %p213 = pneg %p113
        %p214 = pneg %p110
        %s215 = sand.u32 %s100, 1
        %s216 = scalar_lea.sflag [#allocation4], %s215
        %s217 = sand.u32 %s100, 1
        %s218 = smul.addr %s217, 2
        %s219 = scalar_lea.vmem [#allocation7], %s218
        %s220 = smul.u32 2, %s27
        %s221 = smul.u32 2, %s27
        %s222 = smul.u32 2, %s27
        %v223 = vld [vmem:[%s185] sm:$0xff]
        %v224 = vld [vmem:[%s194] sm:$0x3]
        %v226 = vcombine.high %v223, %v223
        %vm228 = vcmask 1043456
        %v229 = vsel %vm228, %v223, -inf
        %v230 = vrot.slane %v229, 4
        %v231 = vmax.f32 %v229, %v230
        %v232 = vrot.slane %v231, 2
        %v233 = vmax.f32 %v231, %v232
        %v234 = vrot.slane %v233, 1
        %v235 = vmax.f32 %v233, %v234
        %v236 = vsel %vm228, %v226, -inf
        %v237 = vrot.slane %v236, 4
        %v238 = vmax.f32 %v236, %v237
        %v239 = vrot.slane %v238, 2
        %v240 = vmax.f32 %v238, %v239
        %v241 = vrot.slane %v240, 1
        %v242 = vmax.f32 %v240, %v241
        %v245 = vcombine.low %v235, %v242
        %v247 = vsub.f32 %v223, %v245
        %v248 = vmul.f32 %v247, 1.442695
        %v249 = vpow.pop %v248
        %v251 = vcombine.high %v249, %v249
        %v253 = vsel %vm228, %v249, 0.0
        %v254 = vrot.slane %v253, 4
        %v255 = vadd.f32 %v253, %v254
        %v256 = vrot.slane %v255, 2
        %v257 = vadd.f32 %v255, %v256
        %v258 = vrot.slane %v257, 1
        %v259 = vadd.f32 %v257, %v258
        %v260 = vsel %vm228, %v251, 0.0
        %v261 = vrot.slane %v260, 4
        %v262 = vadd.f32 %v260, %v261
        %v263 = vrot.slane %v262, 2
        %v264 = vadd.f32 %v262, %v263
        %v265 = vrot.slane %v264, 1
        %v266 = vadd.f32 %v264, %v265
        %v267 = vlaneseq
        %v268 = vshrl.u32 %v267, 7
        %v269 = vlaneseq
        %v270 = vshrl.u32 %v269, 7
        %v271 = vsub.s32 0, %v270
        %v272 = vrot.slane %v224, %v271
        %v273 = vlaneseq
        %v274 = vshrl.u32 %v273, 7
        %v275 = vsub.s32 1, %v274
        %v276 = vrot.slane %v224, %v275
        %vm277 = vcmp.eq.s32.totalorder %v268, %v272
        %vm278 = vcmp.eq.s32.totalorder %v268, %v276
        %v279 = vsel %vm277, %v249, 0.0
        %v280 = vsel %vm278, %v251, 0.0
        %v281 = vsel %vm228, %v279, 0.0
        %v282 = vrot.slane %v281, 4
        %v283 = vadd.f32 %v281, %v282
        %v284 = vrot.slane %v283, 2
        %v285 = vadd.f32 %v283, %v284
        %v286 = vrot.slane %v285, 1
        %v287 = vadd.f32 %v285, %v286
        %v288 = vsel %vm228, %v280, 0.0
        %v289 = vrot.slane %v288, 4
        %v290 = vadd.f32 %v288, %v289
        %v291 = vrot.slane %v290, 2
        %v292 = vadd.f32 %v290, %v291
        %v293 = vrot.slane %v292, 1
        %v294 = vadd.f32 %v292, %v293
        %v295 = vrcp.pop %v259
        %v296 = vmul.f32 %v287, %v295
        %v297 = vrcp.pop %v266
        %v298 = vmul.f32 %v294, %v297
        %v299 = vadd.f32 %v296, 1e-06
        %v300 = vadd.f32 %v298, 1e-06
        %v301 = vlog2.pop %v299
        %v302 = vmul.f32 %v301, 0.6931472
        %v303 = vlog2.pop %v300
        %v304 = vmul.f32 %v303, 0.6931472
        %v305 = vsub.f32 1.0, %v299
        %v306 = vsub.f32 1.0, %v300
        %v307 = vmul.f32 %v305, %v305
        %v308 = vmul.f32 %v306, %v306
        %v309 = vmul.f32 %v307, -0.5
        %v310 = vmul.f32 %v308, -0.5
        %v311 = vmul.f32 %v309, %v302
        %v312 = vmul.f32 %v310, %v304
        %v315 = vcombine.low %v311, %v312
        %v317 = vunpack.c.l.s4 1966171168
        %v318 = vunpack.c.0.s8 %v317
        %v319 = vlaneseq
        %v320 = vshrl.u32 %v319, 7
        %v321 = vsub.s32 %v318, %v320
        %v322 = vrot.slane %v315, %v321
        %v324 = vunpack.c.l.s4 1966171168
        %v325 = vunpack.c.0.s8 %v324
        %v326 = vlaneseq
        %v327 = vshrl.u32 %v326, 7
        %v328 = vsub.s32 %v325, %v327
        %v329 = vrot.slane %v322, %v328
        %v331 = vlaneseq
        %vm332 = vcmp.ge.s32.totalorder %v331, 0
        %vm333 = vcmp.lt.s32.totalorder %v331, 256
        %vm334 = vmand %vm332, %vm333
        %335 = vst.msk [vmem:[%s219] sm:$0x3] %vm334, %v329
        %s336 = sand.u32 %s100, 1
        %s337 = scalar_lea.sflag [#allocation4], %s336
        %s338 = sand.u32 %s100, 1
        %s339 = smul.addr %s338, 2
        %s340 = scalar_lea.vmem [#allocation7], %s339
        // Predicated region
        $region37: #{tpu_custom_call.1} parent=27 // pred_check
          %p341 = pneg %p110
        $region38: #{tpu_custom_call.1} parent=27 // pred_check_branch
          %343 = sbr.rel (%p341) target = $region40
        $region39: #{tpu_custom_call.1} parent=27 // pred_region
          %s344 = smul.u32 2, %s27
          %s346 = ssub.s32 32, 32
          %347 = vsyncadd %s337, %s346
          %s348 = smul.addr %s26, 2
          %s349 = sadd.s32 %s344, %s348
          %s350 = smul.addr %s349, 16
          %s351 = scalar_lea.hbm %s2, %s350
          %s353 = sshll.u32 %s340, 4
          %s354 = int_to_ptr.vmem [resolvable:$true] %s353
          %356 = dma.vmem_to_hbm [thread:$0]  %s354, 32, %s351, %s337
        $region40: #{tpu_custom_call.1} parent=27 // pred_fallthru
          _
      $region28: #{tpu_custom_call.1} parent=5 // pred_fallthru
        _
      %p357 = scmp.le.s32.totalorder 2, %s17
      // Predicated region
      $region41: #{tpu_custom_call.1} parent=5 // pred_check
        %p358 = pneg %p357
      $region42: #{tpu_custom_call.1} parent=5 // pred_check_branch
        %360 = sbr.rel (%p358) target = $region44
      $region43: #{tpu_custom_call.1} parent=5 // pred_region
        %s361 = ssub.s32 %s17, 2
        // Predicated region
        $region45: #{tpu_custom_call.1} parent=43 // pred_check
          %p362 = pneg %p116
        $region46: #{tpu_custom_call.1} parent=43 // pred_check_branch
          %364 = sbr.rel (%p362) target = $region48
        $region47: #{tpu_custom_call.1} parent=43 // pred_region
          %s365 = sand.u32 %s101, 1
          %s366 = scalar_lea.sflag [#allocation4], %s365
          %s367 = sand.u32 %s101, 1
          %s368 = smul.addr %s367, 2
          %s369 = scalar_lea.vmem [#allocation7], %s368
          %370 = dma.done %s366, 32
        $region48: #{tpu_custom_call.1} parent=43 // pred_fallthru
          _
      $region44: #{tpu_custom_call.1} parent=5 // pred_fallthru
        _
    $region6: #{tpu_custom_call.1} parent=1 // loop_footer
      %s21 = sadd.s32 1, %s17
    $region7: #{tpu_custom_call.1} parent=1 // loop_footer_branch
      %16 = sbr.rel target = $region3
    $region8: #{tpu_custom_call.1} parent=1 // loop_exit
      _
    %371 = vsyncpa [#allocation3], 1
    %s372 = scalar_lea.sflag [#allocation3], 1
    %373 = vsyncpa %s372, 1
    %374 = vsyncpa [#allocation6], 1
    %s375 = scalar_lea.sflag [#allocation6], 1
    %376 = vsyncpa %s375, 1
    %377 = vsyncpa [#allocation4], 1
    %s378 = scalar_lea.sflag [#allocation4], 1
    %379 = vsyncpa %s378, 1

</llo_original>
